<compile_context>
chip_gen: v7x
topology: tpu7x:2x2x1
jax: 0.10.0
libtpu: 0.0.40
codegen_flags: <defaults>
</compile_context>

<pallas_src>
import math

import jax
import jax.numpy as jnp
from jax.experimental import pallas as pl
from jax.experimental.pallas import tpu as pltpu

LANE = 128                      # lane width: tiny head outputs padded to this
VMEM_LIMIT = 32 * (1 << 20)     # raised above v5e default, <= v6e/v7x defaults
TILE_BUDGET = 16 * (1 << 20)    # conv/GN per-step VMEM byte budget


def _round_up(n, m):
    return ((n + m - 1) // m) * m


def _pick_d_tile(d):
    """Output-channel tile (multiple of 8) so grid has >=2 D blocks if possible."""
    for t in (128, 64, 32, 16):
        if d % t == 0 and d // t >= 2:
            return t
    return d


def _pick_hw_tile(hw, cin, d_tile, budget=TILE_BUDGET):
    """Largest 128-aligned spatial tile whose per-step buffers fit `budget`."""
    best = 128
    for t in (256, 512, 1024):
        need = (2 * cin * t * 4        # x f32, double-buffered
                + 2 * d_tile * t * 2   # y bf16 out, double-buffered
                + 2 * d_tile * t * 4   # GN-apply f32 out, double-buffered
                + d_tile * cin * 2)    # weight slab
        if need <= budget:
            best = t
    return min(best, _round_up(hw, 128))


def _pad_cols(a, width=LANE):
    pad = width - a.shape[1]
    return jnp.pad(a, ((0, 0), (0, pad))) if pad > 0 else a


# ---------------------------------------------------------------------------
# Pallas kernels
# ---------------------------------------------------------------------------
def _conv1x1_stats_kernel(x_ref, w_ref, b_ref, y_ref, s1_ref, s2_ref,
                          s1_acc, s2_acc):
    """1x1 conv tile (bf16 out) + per-channel sum / sum-of-squares in scratch.

    x_ref:  (1, Cin, T) f32     w_ref: (Dt, Cin) bf16     b_ref: (Dt, 1) f32
    y_ref:  (1, Dt, T)  bf16 (pre-norm conv output)
    s1/s2_ref: (1, Dt, 1) f32 outputs, written once at the last spatial tile.
    s1/s2_acc: (Dt, 1)    f32 VMEM scratch accumulators.
    """
    t = pl.program_id(2)
    x = x_ref[0].astype(jnp.bfloat16)                              # [Cin, T]
    y = jnp.dot(w_ref[...], x, preferred_element_type=jnp.float32) + b_ref[...]
    y_ref[0] = y.astype(y_ref.dtype)                               # bf16 store

    @pl.when(t == 0)
    def _():
        s1_acc[...] = jnp.zeros_like(s1_acc)
        s2_acc[...] = jnp.zeros_like(s2_acc)

    s1_acc[...] += jnp.sum(y, axis=1, keepdims=True)               # f32 stats
    s2_acc[...] += jnp.sum(y * y, axis=1, keepdims=True)

    @pl.when(t == pl.num_programs(2) - 1)
    def _():
        s1_ref[0] = s1_acc[...]
        s2_ref[0] = s2_acc[...]


def _gn_apply_kernel(y_ref, scale_ref, shift_ref, o_ref):
    """GroupNorm apply on one tile: out = y*scale + shift (scale/shift folded)."""
    o_ref[0] = y_ref[0].astype(jnp.float32) * scale_ref[0] + shift_ref[0]


def _heads_kernel(hs_ref, w01_ref, b01_ref, w2_ref, b2_ref, w3_ref, b3_ref,
                  logits_ref, boxes_ref):
    """Fused class_embed + bbox_embed; class W and bbox W1 packed into one RHS.

    hs_ref: (TM, Dh) bf16.  w01: (Dh, LANE+Dh).  Outputs are 128-lane-dense.
    """
    x = hs_ref[...]                                                # bf16
    y01 = jnp.dot(x, w01_ref[...], preferred_element_type=jnp.float32) + b01_ref[...]
    logits_ref[...] = y01[:, :LANE]                                # class logits
    h = jnp.maximum(y01[:, LANE:], 0.0)                            # bbox layer 1
    h = jnp.maximum(jnp.dot(h.astype(jnp.bfloat16), w2_ref[...],
                            preferred_element_type=jnp.float32) + b2_ref[...], 0.0)
    b = jnp.dot(h.astype(jnp.bfloat16), w3_ref[...],
                preferred_element_type=jnp.float32) + b3_ref[...]
    boxes_ref[...] = jax.nn.sigmoid(b)


def _mlp2_kernel(x_ref, w1_ref, b1_ref, w2_ref, b2_ref, o_ref):
    """ref_point_head: 2-layer MLP, bf16 activations, lane-padded output."""
    x = x_ref[...]                                                 # bf16
    h = jnp.maximum(jnp.dot(x, w1_ref[...],
                            preferred_element_type=jnp.float32) + b1_ref[...], 0.0)
    o_ref[...] = jnp.dot(h.astype(jnp.bfloat16), w2_ref[...],
                         preferred_element_type=jnp.float32) + b2_ref[...]


# ---------------------------------------------------------------------------
# Wrappers around pallas_call
# ---------------------------------------------------------------------------
def conv1x1_groupnorm(x_nchw, level_params, num_groups=32, eps=1e-5):
    """input_proj level: Conv2d(Cin, D, k=1) + GroupNorm(num_groups, D), NCHW."""
    wk, bk, gamma, beta = level_params      # wk [D,Cin] bf16, rest [D,1] f32
    B, Cin, H, W = x_nchw.shape
    D = wk.shape[0]
    assert D % num_groups == 0
    HW = H * W
    d_tile = _pick_d_tile(D)
    n_d = D // d_tile
    T = _pick_hw_tile(HW, Cin, d_tile)
    HW_pad = _round_up(HW, T)
    n_t = HW_pad // T

    x = x_nchw.reshape(B, Cin, HW)          # NCHW-native: pure reshape
    if HW_pad != HW:
        x = jnp.pad(x, ((0, 0), (0, 0), (0, HW_pad - HW)))

    y, s1, s2 = pl.pallas_call(
        _conv1x1_stats_kernel,
        out_shape=(jax.ShapeDtypeStruct((B, D, HW_pad), jnp.bfloat16),
                   jax.ShapeDtypeStruct((B, D, 1), jnp.float32),
                   jax.ShapeDtypeStruct((B, D, 1), jnp.float32)),
        grid=(B, n_d, n_t),
        in_specs=[
            pl.BlockSpec((1, Cin, T), lambda b, d, t: (b, 0, t)),
            pl.BlockSpec((d_tile, Cin), lambda b, d, t: (d, 0)),
            pl.BlockSpec((d_tile, 1), lambda b, d, t: (d, 0)),
        ],
        out_specs=[
            pl.BlockSpec((1, d_tile, T), lambda b, d, t: (b, d, t)),
            pl.BlockSpec((1, d_tile, 1), lambda b, d, t: (b, d, 0)),
            pl.BlockSpec((1, d_tile, 1), lambda b, d, t: (b, d, 0)),
        ],
        scratch_shapes=[pltpu.VMEM((d_tile, 1), jnp.float32),
                        pltpu.VMEM((d_tile, 1), jnp.float32)],
        compiler_params=pltpu.CompilerParams(
            dimension_semantics=("parallel", "parallel", "arbitrary"),
            vmem_limit_bytes=VMEM_LIMIT),
    )(x, wk, bk)

    # Tiny per-image group statistics — plain JAX, static group size.
    # Zero-padded spatial columns contribute y = conv bias; correct exactly.
    pad_cnt = float(HW_pad - HW)
    bias = bk[:, 0][None, :]                                        # [1, D]
    s1c = s1[:, :, 0] - pad_cnt * bias                              # [B, D]
    s2c = s2[:, :, 0] - pad_cnt * bias * bias
    gsz = D // num_groups
    n = float(gsz * HW)
    s1g = s1c.reshape(B, num_groups, gsz).sum(-1)                   # [B, G]
    s2g = s2c.reshape(B, num_groups, gsz).sum(-1)
    mean_g = s1g / n
    var_g = jnp.maximum(s2g / n - mean_g * mean_g, 0.0)             # clamp fp32 cancellation
    inv_g = jax.lax.rsqrt(var_g + eps)
    mean_c = jnp.repeat(mean_g, gsz, axis=1)                        # [B, D]
    inv_c = jnp.repeat(inv_g, gsz, axis=1)
    g = gamma[:, 0][None, :]
    scale_c = (g * inv_c).reshape(B, D, 1)                          # folded affine
    shift_c = (beta[:, 0][None, :] - mean_c * g * inv_c).reshape(B, D, 1)

    out = pl.pallas_call(
        _gn_apply_kernel,
        out_shape=jax.ShapeDtypeStruct((B, D, HW_pad), jnp.float32),
        grid=(B, n_d, n_t),
        in_specs=[
            pl.BlockSpec((1, d_tile, T), lambda b, d, t: (b, d, t)),
            pl.BlockSpec((1, d_tile, 1), lambda b, d, t: (b, d, 0)),
            pl.BlockSpec((1, d_tile, 1), lambda b, d, t: (b, d, 0)),
        ],
        out_specs=pl.BlockSpec((1, d_tile, T), lambda b, d, t: (b, d, t)),
        compiler_params=pltpu.CompilerParams(
            dimension_semantics=("parallel", "parallel", "parallel"),
            vmem_limit_bytes=VMEM_LIMIT),
    )(y, scale_c, shift_c)

    if HW_pad != HW:
        out = out[:, :, :HW]
    return out.reshape(B, D, H, W)          # still NCHW


def prediction_heads(params, hs_flat):
    """Fused class_embed + bbox_embed over all (layer, batch, query) rows."""
    N, Dh = hs_flat.shape
    if N >= 512:
        TM = 512
    elif N >= 256:
        TM = 256
    else:
        TM = _round_up(N, 8)
    N_pad = _round_up(N, TM)
    x = hs_flat.astype(jnp.bfloat16)
    if N_pad != N:
        x = jnp.pad(x, ((0, N_pad - N), (0, 0)))

    W01 = params["head_w01"].shape[1]       # LANE + Dh

    logits_pad, boxes_pad = pl.pallas_call(
        _heads_kernel,
        out_shape=(jax.ShapeDtypeStruct((N_pad, LANE), jnp.float32),
                   jax.ShapeDtypeStruct((N_pad, LANE), jnp.float32)),
        grid=(N_pad // TM,),
        in_specs=[
            pl.BlockSpec((TM, Dh), lambda i: (i, 0)),
            pl.BlockSpec((Dh, W01), lambda i: (0, 0)),
            pl.BlockSpec((1, W01), lambda i: (0, 0)),
            pl.BlockSpec((Dh, Dh), lambda i: (0, 0)),
            pl.BlockSpec((1, Dh), lambda i: (0, 0)),
            pl.BlockSpec((Dh, LANE), lambda i: (0, 0)),
            pl.BlockSpec((1, LANE), lambda i: (0, 0)),
        ],
        out_specs=[pl.BlockSpec((TM, LANE), lambda i: (i, 0)),
                   pl.BlockSpec((TM, LANE), lambda i: (i, 0))],
        compiler_params=pltpu.CompilerParams(dimension_semantics=("parallel",)),
    )(x, params["head_w01"], params["head_b01"],
      params["bbox_w2"], params["bbox_b2"],
      params["bbox_w3"], params["bbox_b3"])

    C1 = params["num_classes"] + 1
    return logits_pad[:N, :C1], boxes_pad[:N, :4]


def ref_point_head(params, queries):
    """ref_point_head: MLP(hidden, hidden, init_ref_dim, 2 layers)."""
    Q, Dh = queries.shape
    TM = 256 if Q >= 256 else _round_up(Q, 8)
    Q_pad = _round_up(Q, TM)
    x = queries.astype(jnp.bfloat16)
    if Q_pad != Q:
        x = jnp.pad(x, ((0, Q_pad - Q), (0, 0)))

    out = pl.pallas_call(
        _mlp2_kernel,
        out_shape=jax.ShapeDtypeStruct((Q_pad, LANE), jnp.float32),
        grid=(Q_pad // TM,),
        in_specs=[
            pl.BlockSpec((TM, Dh), lambda i: (i, 0)),
            pl.BlockSpec((Dh, Dh), lambda i: (0, 0)),
            pl.BlockSpec((1, Dh), lambda i: (0, 0)),
            pl.BlockSpec((Dh, LANE), lambda i: (0, 0)),
            pl.BlockSpec((1, LANE), lambda i: (0, 0)),
        ],
        out_specs=pl.BlockSpec((TM, LANE), lambda i: (i, 0)),
        compiler_params=pltpu.CompilerParams(dimension_semantics=("parallel",)),
    )(x, params["ref_w1"], params["ref_b1"], params["ref_w2"], params["ref_b2"])
    return out[:Q, :params["init_ref_dim"]]


# ---------------------------------------------------------------------------
# Deterministic parameter construction (mirrors DETR.__init__ special inits).
# Weights are pre-transposed to [Din, Dout], pre-cast to bf16, lane-padded and
# (for the heads) packed ONCE here, so forward calls feed layout-stable operands.
# ---------------------------------------------------------------------------
def init_params(key, hidden_dim, num_classes, num_queries, backbone_channels,
                init_ref_dim=2, num_groups=32):
    assert num_classes + 1 <= LANE and init_ref_dim <= LANE
    assert hidden_dim % num_groups == 0
    ks = iter(jax.random.split(key, 32))
    p = {"hidden_dim": hidden_dim, "num_classes": num_classes,
         "num_groups": num_groups, "init_ref_dim": init_ref_dim}

    # class_embed: Linear(hidden, C+1); bias = -log((1-p)/p)
    prior_prob = 0.01
    bias_value = -math.log((1 - prior_prob) / prior_prob)
    cw = 0.02 * jax.random.normal(next(ks), (num_classes + 1, hidden_dim), jnp.float32)
    cb = jnp.full((num_classes + 1,), bias_value, jnp.float32)
    class_w = _pad_cols(cw.T)                                       # [Dh, 128] f32
    class_b = _pad_cols(cb.reshape(1, -1))                          # [1, 128] f32

    # bbox_embed: MLP(hidden, hidden, 4, 3); last layer W=0, b=0, b[2:]=-2
    bw1 = 0.02 * jax.random.normal(next(ks), (hidden_dim, hidden_dim), jnp.float32)
    bw2 = 0.02 * jax.random.normal(next(ks), (hidden_dim, hidden_dim), jnp.float32)
    bw3 = jnp.zeros((4, hidden_dim), jnp.float32)
    bb3 = jnp.zeros((4,), jnp.float32).at[2:].set(-2.0)

    # Pack class W with bbox layer-1 W into one wide RHS (shared LHS in kernel).
    p["head_w01"] = jnp.concatenate([class_w, bw1.T], axis=1).astype(jnp.bfloat16)
    p["head_b01"] = jnp.concatenate(
        [class_b, jnp.zeros((1, hidden_dim), jnp.float32)], axis=1)
    p["bbox_w2"] = bw2.T.astype(jnp.bfloat16)
    p["bbox_b2"] = jnp.zeros((1, hidden_dim), jnp.float32)
    p["bbox_w3"] = _pad_cols(bw3.T).astype(jnp.bfloat16)            # [Dh, 128]
    p["bbox_b3"] = _pad_cols(bb3.reshape(1, -1))                    # [1, 128]

    # query_embed: Embedding(num_queries, hidden)
    p["query_embed"] = jax.random.normal(next(ks), (num_queries, hidden_dim),
                                         jnp.float32)

    # ref_point_head: MLP(hidden, hidden, init_ref_dim, 2)
    rw1 = 0.02 * jax.random.normal(next(ks), (hidden_dim, hidden_dim), jnp.float32)
    rw2 = 0.02 * jax.random.normal(next(ks), (init_ref_dim, hidden_dim), jnp.float32)
    p["ref_w1"] = rw1.T.astype(jnp.bfloat16)
    p["ref_b1"] = jnp.zeros((1, hidden_dim), jnp.float32)
    p["ref_w2"] = _pad_cols(rw2.T).astype(jnp.bfloat16)             # [Dh, 128]
    p["ref_b2"] = jnp.zeros((1, LANE), jnp.float32)

    # input_proj per level: Conv2d(Cin, Dh, 1) + GroupNorm(32, Dh)
    proj = []
    for cin in backbone_channels:
        cw_ = 0.05 * jax.random.normal(next(ks), (hidden_dim, cin), jnp.float32)
        proj.append((cw_.astype(jnp.bfloat16),                      # [Dh, Cin] bf16
                     jnp.zeros((hidden_dim, 1), jnp.float32),       # conv bias
                     jnp.ones((hidden_dim, 1), jnp.float32),        # GN gamma
                     jnp.zeros((hidden_dim, 1), jnp.float32)))      # GN beta
    p["input_proj"] = proj
    return p


# ---------------------------------------------------------------------------
# DETR forward (Pallas for the hot path, JAX glue elsewhere)
# ---------------------------------------------------------------------------
def detr_forward(params, features, pos, masks, num_decoder_layers=2):
    hidden_dim = params["hidden_dim"]
    num_classes = params["num_classes"]
    query_embed = params["query_embed"]
    num_queries = query_embed.shape[0]
    num_levels = len(features)

    # input_proj[l]: Conv2d 1x1 + GroupNorm(32, hidden_dim) -> tiled Pallas kernels.
    srcs = [conv1x1_groupnorm(features[l], params["input_proj"][l],
                              num_groups=params["num_groups"])
            for l in range(num_levels)]

    # ms_feats = cat([src, pos], channel dim)   (pure glue)
    ms_feats = [jnp.concatenate([s, p_], axis=1) for s, p_ in zip(srcs, pos)]
    assert len(ms_feats) == num_levels

    # num_feature_levels == 3 -> use level index 2
    src, mask_sel, pos_sel = srcs[2], masks[2], pos[2]
    del mask_sel, pos_sel  # consumed only by the (stubbed) transformer

    # ref_point_head(query_embed) -> Pallas 2-layer MLP (consumed by decoder).
    ref_points = jax.nn.sigmoid(ref_point_head(params, query_embed))

    # TODO(synk): the transformer encoder/decoder is an external module
    # (transformer.py); replaced by a deterministic stand-in producing the
    # decoder hidden states hs [num_layers, B, Q, D] from the selected level.
    B = src.shape[0]
    mem_pool = jnp.mean(src, axis=(2, 3))                           # [B, Dh]
    rp_feat = jnp.pad(ref_points,
                      ((0, 0), (0, hidden_dim - ref_points.shape[1])))  # [Q, Dh]
    hs = jnp.stack([
        jnp.tanh(query_embed[None, :, :]
                 + 0.1 * (lvl + 1) * mem_pool[:, None, :]
                 + 0.05 * rp_feat[None, :, :])
        for lvl in range(num_decoder_layers)]).astype(jnp.bfloat16)  # [L,B,Q,Dh] bf16

    L = hs.shape[0]
    hs_flat = hs.reshape(L * B * num_queries, hidden_dim)

    # Fused prediction heads: class_embed Linear + bbox_embed MLP (+sigmoid),
    # one pallas_call, row-tiled, lane-padded outputs.
    logits, boxes = prediction_heads(params, hs_flat)
    outputs_class = logits.reshape(L, B, num_queries, num_classes + 1)
    outputs_coord = boxes.reshape(L, B, num_queries, 4)

    out = {"pred_logits": outputs_class[-1], "pred_boxes": outputs_coord[-1]}
    # TODO(synk): aux_loss=False and store_results (file I/O) intentionally omitted.
    return out, hs, ms_feats


# ---------------------------------------------------------------------------
if __name__ == "__main__":
    key = jax.random.PRNGKey(0)

    # Small synthetic configuration
    B = 2
    hidden_dim = 32          # transformer.d_model
    num_queries = 8
    num_classes = 7          # -> 8 logits incl. no-object
    num_decoder_layers = 2
    backbone_channels = [8, 16, 32]
    # level 0 exercises the multi-tile + padded-HW accumulation path
    spatial = [(48, 48), (16, 16), (8, 8)]

    params = init_params(key, hidden_dim, num_classes, num_queries,
                         backbone_channels, num_groups=32)

    # TODO(synk): backbone is an external module (backbone.py); synthetic
    # deterministic feature maps / positional encodings stand in for it.
    k_feats = jax.random.split(jax.random.PRNGKey(1), 2 * len(backbone_channels))
    features, pos, masks = [], [], []
    for l, (cin, (h, w)) in enumerate(zip(backbone_channels, spatial)):
        features.append(jax.random.normal(k_feats[2 * l], (B, cin, h, w),
                                          dtype=jnp.float32))
        pos.append(jax.random.normal(k_feats[2 * l + 1], (B, hidden_dim, h, w),
                                     dtype=jnp.float32))
        masks.append(jnp.zeros((B, h, w), dtype=jnp.bool_))

    out, hs, ms_feats = detr_forward(params, features, pos, masks,
                                     num_decoder_layers=num_decoder_layers)
    jax.block_until_ready(out["pred_logits"])
    jax.block_until_ready(out["pred_boxes"])

    assert out["pred_logits"].shape == (B, num_queries, num_classes + 1)
    assert out["pred_boxes"].shape == (B, num_queries, 4)
    assert hs.shape == (num_decoder_layers, B, num_queries, hidden_dim)
    assert all(m.shape[1] == 2 * hidden_dim for m in ms_feats)
    assert bool(jnp.all(jnp.isfinite(out["pred_boxes"])))
    assert bool(jnp.all(jnp.isfinite(out["pred_logits"])))
    print("KERNEL_OK")
</pallas_src>

<mosaic_0001>
module attributes {stable_mosaic.version = 11 : i64} {
  func.func @_conv1x1_stats_kernel(%arg0: i32, %arg1: i32, %arg2: i32, %arg3: memref<1x8x1024xf32, #tpu.memory_space<vmem>>, %arg4: memref<16x8xbf16, #tpu.memory_space<vmem>>, %arg5: memref<16x1xf32, #tpu.memory_space<vmem>>, %arg6: memref<1x16x1024xbf16, #tpu.memory_space<vmem>>, %arg7: memref<1x16x1xf32, #tpu.memory_space<vmem>>, %arg8: memref<1x16x1xf32, #tpu.memory_space<vmem>>, %arg9: memref<16x1xf32, #tpu.memory_space<vmem>>, %arg10: memref<16x1xf32, #tpu.memory_space<vmem>>) attributes {dimension_semantics = [#tpu.dimension_semantics<parallel>, #tpu.dimension_semantics<parallel>, #tpu.dimension_semantics<arbitrary>], iteration_bounds = array<i64: 2, 2, 3>, scalar_prefetch = 0 : i64, scratch_operands = 2 : i64, tpu.core_type = #tpu.core_type<tc>, window_params = [{transform_indices = @transform_0, window_bounds = array<i64: 1, 8, 1024>}, {transform_indices = @transform_1, window_bounds = array<i64: 16, 8>}, {transform_indices = @transform_2, window_bounds = array<i64: 16, 1>}, {transform_indices = @transform_3, window_bounds = array<i64: 1, 16, 1024>}, {transform_indices = @transform_4, window_bounds = array<i64: 1, 16, 1>}, {transform_indices = @transform_5, window_bounds = array<i64: 1, 16, 1>}]} {
    %c0 = arith.constant 0 : index
    %c0_0 = arith.constant 0 : index
    %c0_1 = arith.constant 0 : index
    %0 = vector.load %arg3[%c0, %c0_0, %c0_1] : memref<1x8x1024xf32, #tpu.memory_space<vmem>>, vector<1x8x1024xf32>
    %1 = vector.shape_cast %0 : vector<1x8x1024xf32> to vector<8x1024xf32>
    %2 = arith.truncf %1 : vector<8x1024xf32> to vector<8x1024xbf16>
    %c0_2 = arith.constant 0 : index
    %c0_3 = arith.constant 0 : index
    %3 = vector.load %arg4[%c0_2, %c0_3] : memref<16x8xbf16, #tpu.memory_space<vmem>>, vector<16x8xbf16>
    %cst = arith.constant dense<0.000000e+00> : vector<16x1024xf32>
    %4 = tpu.matmul %3, %2, %cst {dimension_numbers = #tpu.dot_dimension_numbers<[1], [0], [0], [1], [0, 0, 1, 1], [], []>} : vector<16x8xbf16>, vector<8x1024xbf16>, vector<16x1024xf32> -> vector<16x1024xf32>
    %c0_4 = arith.constant 0 : index
    %c0_5 = arith.constant 0 : index
    %5 = vector.load %arg5[%c0_4, %c0_5] : memref<16x1xf32, #tpu.memory_space<vmem>>, vector<16x1xf32>
    %6 = vector.broadcast %5 : vector<16x1xf32> to vector<16x1024xf32>
    %7 = arith.addf %4, %6 : vector<16x1024xf32>
    %8 = arith.truncf %7 : vector<16x1024xf32> to vector<16x1024xbf16>
    %c0_6 = arith.constant 0 : index
    %c0_7 = arith.constant 0 : index
    %c0_8 = arith.constant 0 : index
    %9 = vector.load %arg6[%c0_6, %c0_7, %c0_8] : memref<1x16x1024xbf16, #tpu.memory_space<vmem>>, vector<1x16x1024xbf16>
    %10 = vector.shape_cast %9 : vector<1x16x1024xbf16> to vector<16x1024xbf16>
    %11 = vector.shape_cast %8 : vector<16x1024xbf16> to vector<1x16x1024xbf16>
    tpu.vector_store %arg6[%c0_6, %c0_7, %c0_8], %11 {strides = array<i32>} : memref<1x16x1024xbf16, #tpu.memory_space<vmem>>, vector<1x16x1024xbf16>,
    %c0_i32 = arith.constant 0 : i32
    %12 = arith.cmpi eq, %arg2, %c0_i32 : i32
    %13 = arith.extui %12 : i1 to i32
    %c0_i32_9 = arith.constant 0 : i32
    %14 = arith.cmpi ne, %13, %c0_i32_9 : i32
    scf.if %14 {
      %cst_21 = arith.constant 0.000000e+00 : f32
      %29 = vector.broadcast %cst_21 : f32 to vector<16x1xf32>
      %c0_22 = arith.constant 0 : index
      %c0_23 = arith.constant 0 : index
      %30 = vector.load %arg9[%c0_22, %c0_23] : memref<16x1xf32, #tpu.memory_space<vmem>>, vector<16x1xf32>
      tpu.vector_store %arg9[%c0_22, %c0_23], %29 {strides = array<i32>} : memref<16x1xf32, #tpu.memory_space<vmem>>, vector<16x1xf32>,
      %cst_24 = arith.constant 0.000000e+00 : f32
      %31 = vector.broadcast %cst_24 : f32 to vector<16x1xf32>
      %c0_25 = arith.constant 0 : index
      %c0_26 = arith.constant 0 : index
      %32 = vector.load %arg10[%c0_25, %c0_26] : memref<16x1xf32, #tpu.memory_space<vmem>>, vector<16x1xf32>
      tpu.vector_store %arg10[%c0_25, %c0_26], %31 {strides = array<i32>} : memref<16x1xf32, #tpu.memory_space<vmem>>, vector<16x1xf32>,
    } else {
    }
    %c0_10 = arith.constant 0 : index
    %c0_11 = arith.constant 0 : index
    %15 = vector.load %arg9[%c0_10, %c0_11] : memref<16x1xf32, #tpu.memory_space<vmem>>, vector<16x1xf32>
    %cst_12 = arith.constant dense<0.000000e+00> : vector<16xf32>
    %16 = vector.multi_reduction <add>, %7, %cst_12 [1] : vector<16x1024xf32> to vector<16xf32>
    %17 = vector.shape_cast %16 : vector<16xf32> to vector<16x1xf32>
    %18 = arith.addf %15, %17 : vector<16x1xf32>
    %c0_13 = arith.constant 0 : index
    %c0_14 = arith.constant 0 : index
    %19 = vector.load %arg9[%c0_13, %c0_14] : memref<16x1xf32, #tpu.memory_space<vmem>>, vector<16x1xf32>
    tpu.vector_store %arg9[%c0_13, %c0_14], %18 {strides = array<i32>} : memref<16x1xf32, #tpu.memory_space<vmem>>, vector<16x1xf32>,
    %c0_15 = arith.constant 0 : index
    %c0_16 = arith.constant 0 : index
    %20 = vector.load %arg10[%c0_15, %c0_16] : memref<16x1xf32, #tpu.memory_space<vmem>>, vector<16x1xf32>
    %21 = arith.mulf %7, %7 : vector<16x1024xf32>
    %cst_17 = arith.constant dense<0.000000e+00> : vector<16xf32>
    %22 = vector.multi_reduction <add>, %21, %cst_17 [1] : vector<16x1024xf32> to vector<16xf32>
    %23 = vector.shape_cast %22 : vector<16xf32> to vector<16x1xf32>
    %24 = arith.addf %20, %23 : vector<16x1xf32>
    %c0_18 = arith.constant 0 : index
    %c0_19 = arith.constant 0 : index
    %25 = vector.load %arg10[%c0_18, %c0_19] : memref<16x1xf32, #tpu.memory_space<vmem>>, vector<16x1xf32>
    tpu.vector_store %arg10[%c0_18, %c0_19], %24 {strides = array<i32>} : memref<16x1xf32, #tpu.memory_space<vmem>>, vector<16x1xf32>,
    %c2_i32 = arith.constant 2 : i32
    %26 = arith.cmpi eq, %arg2, %c2_i32 : i32
    %27 = arith.extui %26 : i1 to i32
    %c0_i32_20 = arith.constant 0 : i32
    %28 = arith.cmpi ne, %27, %c0_i32_20 : i32
    scf.if %28 {
      %c0_21 = arith.constant 0 : index
      %c0_22 = arith.constant 0 : index
      %29 = vector.load %arg9[%c0_21, %c0_22] : memref<16x1xf32, #tpu.memory_space<vmem>>, vector<16x1xf32>
      %c0_23 = arith.constant 0 : index
      %c0_24 = arith.constant 0 : index
      %c0_25 = arith.constant 0 : index
      %30 = vector.load %arg7[%c0_23, %c0_24, %c0_25] : memref<1x16x1xf32, #tpu.memory_space<vmem>>, vector<1x16x1xf32>
      %31 = vector.shape_cast %30 : vector<1x16x1xf32> to vector<16x1xf32>
      %32 = vector.shape_cast %29 : vector<16x1xf32> to vector<1x16x1xf32>
      tpu.vector_store %arg7[%c0_23, %c0_24, %c0_25], %32 {strides = array<i32>} : memref<1x16x1xf32, #tpu.memory_space<vmem>>, vector<1x16x1xf32>,
      %c0_26 = arith.constant 0 : index
      %c0_27 = arith.constant 0 : index
      %33 = vector.load %arg10[%c0_26, %c0_27] : memref<16x1xf32, #tpu.memory_space<vmem>>, vector<16x1xf32>
      %c0_28 = arith.constant 0 : index
      %c0_29 = arith.constant 0 : index
      %c0_30 = arith.constant 0 : index
      %34 = vector.load %arg8[%c0_28, %c0_29, %c0_30] : memref<1x16x1xf32, #tpu.memory_space<vmem>>, vector<1x16x1xf32>
      %35 = vector.shape_cast %34 : vector<1x16x1xf32> to vector<16x1xf32>
      %36 = vector.shape_cast %33 : vector<16x1xf32> to vector<1x16x1xf32>
      tpu.vector_store %arg8[%c0_28, %c0_29, %c0_30], %36 {strides = array<i32>} : memref<1x16x1xf32, #tpu.memory_space<vmem>>, vector<1x16x1xf32>,
    } else {
    }
    return
  }
  func.func @transform_0(%arg0: i32, %arg1: i32, %arg2: i32) -> (i32, i32, i32) {
    %c0_i32 = arith.constant 0 : i32
    %c0_i32_0 = arith.constant 0 : i32
    return %arg0, %c0_i32, %arg2 : i32, i32, i32
  }
  func.func @transform_1(%arg0: i32, %arg1: i32, %arg2: i32) -> (i32, i32) {
    %c0_i32 = arith.constant 0 : i32
    %c0_i32_0 = arith.constant 0 : i32
    return %arg1, %c0_i32 : i32, i32
  }
  func.func @transform_2(%arg0: i32, %arg1: i32, %arg2: i32) -> (i32, i32) {
    %c0_i32 = arith.constant 0 : i32
    %c0_i32_0 = arith.constant 0 : i32
    return %arg1, %c0_i32 : i32, i32
  }
  func.func @transform_3(%arg0: i32, %arg1: i32, %arg2: i32) -> (i32, i32, i32) {
    %c0_i32 = arith.constant 0 : i32
    return %arg0, %arg1, %arg2 : i32, i32, i32
  }
  func.func @transform_4(%arg0: i32, %arg1: i32, %arg2: i32) -> (i32, i32, i32) {
    %c0_i32 = arith.constant 0 : i32
    %c0_i32_0 = arith.constant 0 : i32
    return %arg0, %arg1, %c0_i32 : i32, i32, i32
  }
  func.func @transform_5(%arg0: i32, %arg1: i32, %arg2: i32) -> (i32, i32, i32) {
    %c0_i32 = arith.constant 0 : i32
    %c0_i32_0 = arith.constant 0 : i32
    return %arg0, %arg1, %c0_i32 : i32, i32, i32
  }
}

</mosaic_0001>

<llo_original>
// kernel: tpu_custom_call.1
$region0: #{tpu_custom_call.1}
  #allocation0 [shape = 'u32[]', space=smem, size = 0x4, offset = 0x4, fixed_abs, tag = 'smem constant byte address 0x4 - core index']
  #allocation1 [shape = 'u32[144,128]{1,0:T(1,128)}', space=vmem, size = 0x12000, scoped, tag = 'internal scratch']
  #allocation2 [shape = 'f32[16,1]{1,0:T(8,128)}', space=vmem, size = 0x2000, scoped, tag = 'scratch operand']
  #allocation3 [shape = 'f32[16,1]{1,0:T(8,128)}', space=vmem, size = 0x2000, scoped, tag = 'scratch operand']
  %s0 = inlined_call_operand.hbm [shape: f32[2,8,3072], index: 0, kind: input, shape index: {}]
  %s1 = inlined_call_operand.vmem [shape: bf16[32,8], index: 1, kind: input, shape index: {}]
  %s2 = inlined_call_operand.vmem [shape: f32[32,1], index: 2, kind: input, shape index: {}]
  %s3 = inlined_call_operand.hbm [shape: bf16[2,32,3072], index: 3, kind: output, shape index: {0}]
  %s4 = inlined_call_operand.vmem [shape: f32[2,32,1], index: 4, kind: output, shape index: {1}]
  %s5 = inlined_call_operand.vmem [shape: f32[2,32,1], index: 5, kind: output, shape index: {2}]
  %6 = xla_tuple %s3, %s4, %s5
  %s7 = sld [smem:[#allocation0]]
  $region73: #{tpu_custom_call.1} parent=0
    _
  %s9 = ssub.s32 1, %s7
  %s10 = scalar_select 0, %s9, %s7
  $region1: #{tpu_custom_call.1} parent=0
    #allocation4 [shape = 'u8[65536]{0}', space=vmem, size = 0x10000, scoped, tag = 'input window, operand 0']
    #allocation5 [shape = 's32[2]{0}', space=sflag, size = 0x8, scoped, tag = 'scoped memory for tpu_custom_call.1']
    #allocation6 [shape = 's32[2]{0}', space=sflag, size = 0x8, scoped, tag = 'scoped memory for tpu_custom_call.1']
    #allocation7 [shape = 'u8[65536]{0}', space=vmem, size = 0x10000, scoped, tag = 'output window, operand 0']
    %11 = vsyncpa [#allocation5], 0
    %s12 = scalar_lea.sflag [#allocation5], 1
    %13 = vsyncpa %s12, 0
    %14 = vsyncpa [#allocation6], 0
    %s15 = scalar_lea.sflag [#allocation6], 1
    %16 = vsyncpa %s15, 0
    loop: start=0, step=1, limit=14
    $region2: #{tpu_custom_call.1} parent=1 // loop_pre_header
      _
    $region3: #{tpu_custom_call.1} parent=1 // loop_header
      %s18 = sphi 0, %s22
      %p19 = scmp.ge.s32.totalorder %s18, 14
      %s25 = sphi 0, %s44
      %s26 = sphi 0, %s40
      %s27 = sphi 0, %s36
      %s28 = sphi 0, %s25
      %s29 = sphi 0, %s26
      %s30 = sphi 0, %s27
      %s31 = sphi 0, %s28
      %s32 = sphi 0, %s29
      %s33 = sphi 0, %s30
      %s49 = sphi 0, %s51
      %s52 = sphi 0, %s49
      %s53 = sphi 0, %s52
      %s69 = sphi 0, %s53
      %s75 = sphi 0, %s77
      %s78 = sphi 0, %s75
      %s79 = sphi 0, %s78
      %s95 = sphi 0, %s79
      %s101 = sphi 0, %s103
      %s104 = sphi 0, %s101
      %s105 = sphi 0, %s104
      %s121 = sphi 0, %s105
      %s131 = sphi 0, %s133
      %s134 = sphi 0, %s131
      %s135 = sphi 0, %s134
      %s151 = sphi 0, %s135
      %s159 = sphi 0, %s161
      %s162 = sphi 0, %s159
      %s163 = sphi 0, %s162
      %s179 = sphi 0, %s163
      %s187 = sphi 0, %s189
      %s190 = sphi 0, %s187
      %s191 = sphi 0, %s190
      %s207 = sphi 0, %s191
    $region4: #{tpu_custom_call.1} parent=1 // loop_header_branch
      %21 = sbr.rel (%p19) target = $region8
    $region5: #{tpu_custom_call.1} parent=1 // loop_body
      %s23 = ssub.s32 %s18, 1
      %s24 = ssub.s32 %s18, 2
      %s34 = sadd.s32 1, %s27
      %p35 = scmp.ge.s32.totalorder %s34, 3
      %s36 = scalar_select %p35, 0, %s34
      %s37 = sadd.s32 1, %s26
      %s38 = scalar_select %p35, %s37, %s26
      %p39 = scmp.ge.s32.totalorder %s38, 2
      %s40 = scalar_select %p39, 0, %s38
      %s41 = sadd.s32 1, %s25
      %s42 = scalar_select %p39, %s41, %s25
      %p43 = scmp.ge.s32.totalorder %s42, 2
      %s44 = scalar_select %p43, 0, %s42
      %s45 = ssub.s32 %s25, %s44
      %s46 = ssub.s32 %s27, %s36
      %s47 = sor.u32 %s45, %s46
      %p48 = scmp.eq.s32.totalorder %s47, 0
      %s50 = sadd.s32 %s49, 1
      %s51 = scalar_select %p48, %s49, %s50
      %p54 = pneg %p48
      %p55 = scmp.eq.s32.totalorder %s18, 11
      %p56 = por %p54, %p55
      %p57 = scmp.ne.s32.totalorder %s49, %s52
      %p58 = scmp.eq.s32.totalorder %s18, 0
      %p59 = por %p57, %p58
      %p60 = scmp.ne.s32.totalorder %s49, %s52
      %p61 = scmp.eq.s32.totalorder %s23, 11
      %p62 = por %p60, %p61
      %p63 = scmp.ne.s32.totalorder %s52, %s53
      %p64 = scmp.eq.s32.totalorder %s23, 0
      %p65 = por %p63, %p64
      %p66 = scmp.ne.s32.totalorder %s52, %s53
      %p67 = scmp.eq.s32.totalorder %s24, 11
      %p68 = por %p66, %p67
      %p70 = scmp.ne.s32.totalorder %s53, %s69
      %p71 = scmp.eq.s32.totalorder %s24, 0
      %p72 = por %p70, %p71
      %s73 = ssub.s32 %s26, %s40
      %p74 = scmp.eq.s32.totalorder %s73, 0
      %s76 = sadd.s32 %s75, 1
      %s77 = scalar_select %p74, %s75, %s76
      %p80 = pneg %p74
      %p81 = scmp.eq.s32.totalorder %s18, 11
      %p82 = por %p80, %p81
      %p83 = scmp.ne.s32.totalorder %s75, %s78
      %p84 = scmp.eq.s32.totalorder %s18, 0
      %p85 = por %p83, %p84
      %p86 = scmp.ne.s32.totalorder %s75, %s78
      %p87 = scmp.eq.s32.totalorder %s23, 11
      %p88 = por %p86, %p87
      %p89 = scmp.ne.s32.totalorder %s78, %s79
      %p90 = scmp.eq.s32.totalorder %s23, 0
      %p91 = por %p89, %p90
      %p92 = scmp.ne.s32.totalorder %s78, %s79
      %p93 = scmp.eq.s32.totalorder %s24, 11
      %p94 = por %p92, %p93
      %p96 = scmp.ne.s32.totalorder %s79, %s95
      %p97 = scmp.eq.s32.totalorder %s24, 0
      %p98 = por %p96, %p97
      %s99 = ssub.s32 %s26, %s40
      %p100 = scmp.eq.s32.totalorder %s99, 0
      %s102 = sadd.s32 %s101, 1
      %s103 = scalar_select %p100, %s101, %s102
      %p106 = pneg %p100
      %p107 = scmp.eq.s32.totalorder %s18, 11
      %p108 = por %p106, %p107
      %p109 = scmp.ne.s32.totalorder %s101, %s104
      %p110 = scmp.eq.s32.totalorder %s18, 0
      %p111 = por %p109, %p110
      %p112 = scmp.ne.s32.totalorder %s101, %s104
      %p113 = scmp.eq.s32.totalorder %s23, 11
      %p114 = por %p112, %p113
      %p115 = scmp.ne.s32.totalorder %s104, %s105
      %p116 = scmp.eq.s32.totalorder %s23, 0
      %p117 = por %p115, %p116
      %p118 = scmp.ne.s32.totalorder %s104, %s105
      %p119 = scmp.eq.s32.totalorder %s24, 11
      %p120 = por %p118, %p119
      %p122 = scmp.ne.s32.totalorder %s105, %s121
      %p123 = scmp.eq.s32.totalorder %s24, 0
      %p124 = por %p122, %p123
      %s125 = ssub.s32 %s25, %s44
      %s126 = ssub.s32 %s26, %s40
      %s127 = sor.u32 %s125, %s126
      %s128 = ssub.s32 %s27, %s36
      %s129 = sor.u32 %s127, %s128
      %p130 = scmp.eq.s32.totalorder %s129, 0
      %s132 = sadd.s32 %s131, 1
      %s133 = scalar_select %p130, %s131, %s132
      %p136 = pneg %p130
      %p137 = scmp.eq.s32.totalorder %s18, 11
      %p138 = por %p136, %p137
      %p139 = scmp.ne.s32.totalorder %s131, %s134
      %p140 = scmp.eq.s32.totalorder %s18, 0
      %p141 = por %p139, %p140
      %p142 = scmp.ne.s32.totalorder %s131, %s134
      %p143 = scmp.eq.s32.totalorder %s23, 11
      %p144 = por %p142, %p143
      %p145 = scmp.ne.s32.totalorder %s134, %s135
      %p146 = scmp.eq.s32.totalorder %s23, 0
      %p147 = por %p145, %p146
      %p148 = scmp.ne.s32.totalorder %s134, %s135
      %p149 = scmp.eq.s32.totalorder %s24, 11
      %p150 = por %p148, %p149
      %p152 = scmp.ne.s32.totalorder %s135, %s151
      %p153 = scmp.eq.s32.totalorder %s24, 0
      %p154 = por %p152, %p153
      %s155 = ssub.s32 %s25, %s44
      %s156 = ssub.s32 %s26, %s40
      %s157 = sor.u32 %s155, %s156
      %p158 = scmp.eq.s32.totalorder %s157, 0
      %s160 = sadd.s32 %s159, 1
      %s161 = scalar_select %p158, %s159, %s160
      %p164 = pneg %p158
      %p165 = scmp.eq.s32.totalorder %s18, 11
      %p166 = por %p164, %p165
      %p167 = scmp.ne.s32.totalorder %s159, %s162
      %p168 = scmp.eq.s32.totalorder %s18, 0
      %p169 = por %p167, %p168
      %p170 = scmp.ne.s32.totalorder %s159, %s162
      %p171 = scmp.eq.s32.totalorder %s23, 11
      %p172 = por %p170, %p171
      %p173 = scmp.ne.s32.totalorder %s162, %s163
      %p174 = scmp.eq.s32.totalorder %s23, 0
      %p175 = por %p173, %p174
      %p176 = scmp.ne.s32.totalorder %s162, %s163
      %p177 = scmp.eq.s32.totalorder %s24, 11
      %p178 = por %p176, %p177
      %p180 = scmp.ne.s32.totalorder %s163, %s179
      %p181 = scmp.eq.s32.totalorder %s24, 0
      %p182 = por %p180, %p181
      %s183 = ssub.s32 %s25, %s44
      %s184 = ssub.s32 %s26, %s40
      %s185 = sor.u32 %s183, %s184
      %p186 = scmp.eq.s32.totalorder %s185, 0
      %s188 = sadd.s32 %s187, 1
      %s189 = scalar_select %p186, %s187, %s188
      %p192 = pneg %p186
      %p193 = scmp.eq.s32.totalorder %s18, 11
      %p194 = por %p192, %p193
      %p195 = scmp.ne.s32.totalorder %s187, %s190
      %p196 = scmp.eq.s32.totalorder %s18, 0
      %p197 = por %p195, %p196
      %p198 = scmp.ne.s32.totalorder %s187, %s190
      %p199 = scmp.eq.s32.totalorder %s23, 11
      %p200 = por %p198, %p199
      %p201 = scmp.ne.s32.totalorder %s190, %s191
      %p202 = scmp.eq.s32.totalorder %s23, 0
      %p203 = por %p201, %p202
      %p204 = scmp.ne.s32.totalorder %s190, %s191
      %p205 = scmp.eq.s32.totalorder %s24, 11
      %p206 = por %p204, %p205
      %p208 = scmp.ne.s32.totalorder %s191, %s207
      %p209 = scmp.eq.s32.totalorder %s24, 0
      %p210 = por %p208, %p209
      %p211 = scmp.le.s32.totalorder 1, %s18
      %p212 = scmp.lt.s32.totalorder %s18, 13
      %p213 = pnand %p211, %p212
      %p214 = pneg %p213
      // Predicated region
      $region9: #{tpu_custom_call.1} parent=5 // pred_check
        _
      $region10: #{tpu_custom_call.1} parent=5 // pred_check_branch
        %216 = sbr.rel (%p213) target = $region12
      $region11: #{tpu_custom_call.1} parent=5 // pred_region
        %s217 = ssub.s32 %s18, 1
      $region12: #{tpu_custom_call.1} parent=5 // pred_fallthru
        _
      %p218 = scmp.lt.s32.totalorder %s18, 12
      // Predicated region
      $region13: #{tpu_custom_call.1} parent=5 // pred_check
        %p219 = pneg %p218
      $region14: #{tpu_custom_call.1} parent=5 // pred_check_branch
        %221 = sbr.rel (%p219) target = $region16
      $region15: #{tpu_custom_call.1} parent=5 // pred_region
        // Predicated region
        $region17: #{tpu_custom_call.1} parent=15 // pred_check
          %p222 = pneg %p59
        $region18: #{tpu_custom_call.1} parent=15 // pred_check_branch
          %224 = sbr.rel (%p222) target = $region20
        $region19: #{tpu_custom_call.1} parent=15 // pred_region
          %s225 = sand.u32 %s49, 1
          %s226 = scalar_lea.sflag [#allocation5], %s225
          %s227 = sand.u32 %s49, 1
          %s228 = smul.addr %s227, 64
          %s229 = scalar_lea.vmem [#allocation4], %s228
          %s230 = smul.u32 8, %s27
          %s232 = ssub.s32 1024, 1024
          %233 = vsyncadd %s226, %s232
          %s234 = smul.addr %s25, 24
          %s235 = sadd.s32 %s230, %s234
          %s236 = smul.addr %s235, 128
          %s237 = scalar_lea.hbm %s0, %s236
          %s239 = sshll.u32 %s229, 4
          %s240 = int_to_ptr.vmem [resolvable:$true] %s239
          %242 = dma.hbm_to_vmem [thread:$0]  %s237, 1024, %s240, %s226
        $region20: #{tpu_custom_call.1} parent=15 // pred_fallthru
          _
        // Predicated region
        $region21: #{tpu_custom_call.1} parent=15 // pred_check
          %p243 = pneg %p85
        $region22: #{tpu_custom_call.1} parent=15 // pred_check_branch
          %245 = sbr.rel (%p243) target = $region24
        $region23: #{tpu_custom_call.1} parent=15 // pred_region
          %s246 = smul.u32 2, %s26
          %p247 = scmp.lt.s32.totalorder %s246, 3
          %s248 = scalar_select %p247, %s246, 3
          %s249 = smul.addr %s248, 4
          %s250 = scalar_lea.vmem %s1, %s249
          %s251 = smul.u32 2, %s26
        $region24: #{tpu_custom_call.1} parent=15 // pred_fallthru
          _
        // Predicated region
        $region25: #{tpu_custom_call.1} parent=15 // pred_check
          %p252 = pneg %p111
        $region26: #{tpu_custom_call.1} parent=15 // pred_check_branch
          %254 = sbr.rel (%p252) target = $region28
        $region27: #{tpu_custom_call.1} parent=15 // pred_region
          %s255 = smul.u32 2, %s26
          %p256 = scmp.lt.s32.totalorder %s255, 3
          %s257 = scalar_select %p256, %s255, 3
          %s258 = smul.addr %s257, 8
          %s259 = scalar_lea.vmem %s2, %s258
          %s260 = smul.u32 2, %s26
        $region28: #{tpu_custom_call.1} parent=15 // pred_fallthru
          _
      $region16: #{tpu_custom_call.1} parent=5 // pred_fallthru
        _
      %p261 = scmp.le.s32.totalorder 1, %s18
      %p262 = scmp.lt.s32.totalorder %s18, 13
      %p263 = pnand %p261, %p262
      %p264 = pneg %p263
      // Predicated region
      $region29: #{tpu_custom_call.1} parent=5 // pred_check
        _
      $region30: #{tpu_custom_call.1} parent=5 // pred_check_branch
        %266 = sbr.rel (%p263) target = $region32
      $region31: #{tpu_custom_call.1} parent=5 // pred_region
        %s267 = ssub.s32 %s18, 1
        %s268 = sand.u32 %s52, 1
        %s269 = scalar_lea.sflag [#allocation5], %s268
        %s270 = sand.u32 %s52, 1
        %s271 = smul.addr %s270, 64
        %s272 = scalar_lea.vmem [#allocation4], %s271
        // Predicated region
        $region33: #{tpu_custom_call.1} parent=31 // pred_check
          %p273 = pneg %p65
        $region34: #{tpu_custom_call.1} parent=31 // pred_check_branch
          %275 = sbr.rel (%p273) target = $region36
        $region35: #{tpu_custom_call.1} parent=31 // pred_region
          %276 = dma.done %s269, 1024
        $region36: #{tpu_custom_call.1} parent=31 // pred_fallthru
          _
        %s277 = sand.u32 %s52, 1
        %s278 = scalar_lea.sflag [#allocation5], %s277
        %s279 = sand.u32 %s52, 1
        %s280 = smul.addr %s279, 64
        %s281 = scalar_lea.vmem [#allocation4], %s280
        %p282 = pneg %p65
        %p283 = pneg %p62
        %s284 = smul.u32 2, %s29
        %p285 = scmp.lt.s32.totalorder %s284, 3
        %s286 = scalar_select %p285, %s284, 3
        %s287 = smul.addr %s286, 4
        %s288 = scalar_lea.vmem %s1, %s287
        %p289 = pneg %p91
        %p290 = pneg %p88
        %s291 = smul.u32 2, %s29
        %p292 = scmp.lt.s32.totalorder %s291, 3
        %s293 = scalar_select %p292, %s291, 3
        %s294 = smul.addr %s293, 8
        %s295 = scalar_lea.vmem %s2, %s294
        %p296 = pneg %p117
        %p297 = pneg %p114
        %p298 = pneg %p147
        %p299 = pneg %p144
        %s300 = sand.u32 %s134, 1
        %s301 = scalar_lea.sflag [#allocation6], %s300
        %s302 = sand.u32 %s134, 1
        %s303 = smul.addr %s302, 64
        %s304 = scalar_lea.vmem [#allocation7], %s303
        %p305 = pneg %p175
        %p306 = pneg %p172
        %s307 = smul.u32 2, %s29
        %p308 = scmp.lt.s32.totalorder %s28, 1
        %s309 = scalar_select %p308, %s28, 1
        %p310 = scmp.lt.s32.totalorder %s307, 3
        %s311 = scalar_select %p310, %s307, 3
        %s312 = smul.addr %s309, 4
        %s313 = sadd.s32 %s311, %s312
        %s314 = smul.addr %s313, 8
        %s315 = scalar_lea.vmem %s4, %s314
        %p316 = pneg %p203
        %p317 = pneg %p200
        %s318 = smul.u32 2, %s29
        %p319 = scmp.lt.s32.totalorder %s28, 1
        %s320 = scalar_select %p319, %s28, 1
        %p321 = scmp.lt.s32.totalorder %s318, 3
        %s322 = scalar_select %p321, %s318, 3
        %s323 = smul.addr %s320, 4
        %s324 = sadd.s32 %s322, %s323
        %s325 = smul.addr %s324, 8
        %s326 = scalar_lea.vmem %s5, %s325
        %s327 = smul.u32 8, %s30
        %s328 = smul.u32 2, %s29
        %p329 = scmp.lt.s32.totalorder %s328, 3
        %s330 = scalar_select %p329, %s328, 3
        %s331 = smul.addr %s330, 4
        %s332 = scalar_lea.vmem %s1, %s331
        %s333 = smul.u32 2, %s29
        %s334 = smul.u32 2, %s29
        %p335 = scmp.lt.s32.totalorder %s334, 3
        %s336 = scalar_select %p335, %s334, 3
        %s337 = smul.addr %s336, 8
        %s338 = scalar_lea.vmem %s2, %s337
        %s339 = smul.u32 2, %s29
        %s340 = smul.u32 2, %s29
        %s341 = smul.u32 8, %s30
        %s342 = smul.u32 2, %s29
        %p343 = scmp.lt.s32.totalorder %s28, 1
        %s344 = scalar_select %p343, %s28, 1
        %p345 = scmp.lt.s32.totalorder %s342, 3
        %s346 = scalar_select %p345, %s342, 3
        %s347 = smul.addr %s344, 4
        %s348 = sadd.s32 %s346, %s347
        %s349 = smul.addr %s348, 8
        %s350 = scalar_lea.vmem %s4, %s349
        %s351 = smul.u32 2, %s29
        %s352 = smul.u32 2, %s29
        %p353 = scmp.lt.s32.totalorder %s28, 1
        %s354 = scalar_select %p353, %s28, 1
        %p355 = scmp.lt.s32.totalorder %s352, 3
        %s356 = scalar_select %p355, %s352, 3
        %s357 = smul.addr %s354, 4
        %s358 = sadd.s32 %s356, %s357
        %s359 = smul.addr %s358, 8
        %s360 = scalar_lea.vmem %s5, %s359
        %s361 = smul.u32 2, %s29
        %v363 = vld [vmem:[%s272] sm:$0xff]
        %v364 = vld [vmem:[%s272 + $0x8] sm:$0xff]
        %v365 = vld [vmem:[%s272 + $0x10] sm:$0xff]
        %v366 = vld [vmem:[%s272 + $0x18] sm:$0xff]
        %v367 = vld [vmem:[%s272 + $0x20] sm:$0xff]
        %v368 = vld [vmem:[%s272 + $0x28] sm:$0xff]
        %v369 = vld [vmem:[%s272 + $0x30] sm:$0xff]
        %v370 = vld [vmem:[%s272 + $0x38] sm:$0xff]
        %v371 = vpack.c.bf16 %v363, %v363
        %v372 = vpack.c.bf16 %v364, %v364
        %v373 = vpack.c.bf16 %v365, %v365
        %v374 = vpack.c.bf16 %v366, %v366
        %v375 = vpack.c.bf16 %v367, %v367
        %v376 = vpack.c.bf16 %v368, %v368
        %v377 = vpack.c.bf16 %v369, %v369
        %v378 = vpack.c.bf16 %v370, %v370
        %v379 = vld [vmem:[%s332] sm:$0xf]
        %v380 = vld [vmem:[%s332 + $0x4] sm:$0xf]
        %v381 = vld [vmem:[%s338] sm:$0xff]
        %v382 = vld [vmem:[%s338 + $0x8] sm:$0xff]
        %384 = vset.pattern.permute.xlu0 0
        %385 = vperm.xlu0 %384, %v381
        %v386 = vpop.permute.xlu0 %385
        %389 = vset.pattern.permute.xlu0 0
        %390 = vperm.xlu0 %389, %v382
        %v391 = vpop.permute.xlu0 %390
        %v395 = vunpack.c.l.b16 %v379
        %v396 = vunpack.c.l.b16 %v380
        %v397 = vpack.c.b16 %v396, %v395
        %vm398 = vcmask 64512
        %v400 = vsel %vm398, %v397, 0
        %vm402 = vcmask 1043456
        %v404 = vsel %vm402, %v371, 0
        %v407 = vsel %vm402, %v372, 0
        %v410 = vsel %vm402, %v373, 0
        %v413 = vsel %vm402, %v374, 0
        %v416 = vsel %vm402, %v375, 0
        %v419 = vsel %vm402, %v376, 0
        %v422 = vsel %vm402, %v377, 0
        %v425 = vsel %vm402, %v378, 0
        %427 = vmatprep.subr.bf16.mxu0 %v407
        %428 = vmatpush1.bf16.msra.mxu0 %v404
        %429 = vmatprep.subr.bf16.mxu0 0
        %430 = vmatpush1.bf16.msra.mxu0 0
        %431 = vmatprep.subr.bf16.mxu0 0
        %432 = vmatpush1.bf16.msra.mxu0 0
        %433 = vmatprep.subr.bf16.mxu0 0
        %434 = vmatpush1.bf16.msra.mxu0 0
        %435 = vmatprep.subr.bf16.mxu0 0
        %436 = vmatpush1.bf16.msra.mxu0 0
        %437 = vmatprep.subr.bf16.mxu0 0
        %438 = vmatpush1.bf16.msra.mxu0 0
        %439 = vmatprep.subr.bf16.mxu0 0
        %440 = vmatpush1.bf16.msra.mxu0 0
        %441 = vmatprep.subr.bf16.mxu0 0
        %442 = vmatpush1.bf16.msra.mxu0 0
        %443 = vmatprep.subr.bf16.mxu0 0
        %444 = vmatpush1.bf16.msra.mxu0 0
        %445 = vmatprep.subr.bf16.mxu0 0
        %446 = vmatpush1.bf16.msra.mxu0 0
        %447 = vmatprep.subr.bf16.mxu0 0
        %448 = vmatpush1.bf16.msra.mxu0 0
        %449 = vmatprep.subr.bf16.mxu0 0
        %450 = vmatpush1.bf16.msra.mxu0 0
        %451 = vmatprep.subr.bf16.mxu0 0
        %452 = vmatpush1.bf16.msra.mxu0 0
        %453 = vmatprep.subr.bf16.mxu0 0
        %454 = vmatpush1.bf16.msra.mxu0 0
        %455 = vmatprep.subr.bf16.mxu0 0
        %456 = vmatpush1.bf16.msra.mxu0 0
        %457 = vmatprep.subr.bf16.mxu0 0
        %458 = vmatpush1.bf16.msra.mxu0 0
        %459 = vmatprep.mubr.bf16.mxu0 0
        %460 = vmatmul.mubr.bf16.gmra.mrb[0].mxu0 %v400
        %v461 = vpop.f32.mrb[0].mxu0
        %v462 = vadd.f32 %v386, %v461
        %v463 = vpop.f32.mrb[0].mxu0
        %v464 = vadd.f32 %v386, %v463
        %v465 = vpop.f32.mrb[0].mxu0
        %v466 = vadd.f32 %v391, %v465
        %v467 = vpop.f32.mrb[0].mxu0
        %v468 = vadd.f32 %v391, %v467
        %469 = vdwg.mxu0
        %470 = vmatprep.subr.bf16.mxu0 %v413
        %471 = vmatpush1.bf16.msra.mxu0 %v410
        %472 = vmatprep.subr.bf16.mxu0 0
        %473 = vmatpush1.bf16.msra.mxu0 0
        %474 = vmatprep.subr.bf16.mxu0 0
        %475 = vmatpush1.bf16.msra.mxu0 0
        %476 = vmatprep.subr.bf16.mxu0 0
        %477 = vmatpush1.bf16.msra.mxu0 0
        %478 = vmatprep.subr.bf16.mxu0 0
        %479 = vmatpush1.bf16.msra.mxu0 0
        %480 = vmatprep.subr.bf16.mxu0 0
        %481 = vmatpush1.bf16.msra.mxu0 0
        %482 = vmatprep.subr.bf16.mxu0 0
        %483 = vmatpush1.bf16.msra.mxu0 0
        %484 = vmatprep.subr.bf16.mxu0 0
        %485 = vmatpush1.bf16.msra.mxu0 0
        %486 = vmatprep.subr.bf16.mxu0 0
        %487 = vmatpush1.bf16.msra.mxu0 0
        %488 = vmatprep.subr.bf16.mxu0 0
        %489 = vmatpush1.bf16.msra.mxu0 0
        %490 = vmatprep.subr.bf16.mxu0 0
        %491 = vmatpush1.bf16.msra.mxu0 0
        %492 = vmatprep.subr.bf16.mxu0 0
        %493 = vmatpush1.bf16.msra.mxu0 0
        %494 = vmatprep.subr.bf16.mxu0 0
        %495 = vmatpush1.bf16.msra.mxu0 0
        %496 = vmatprep.subr.bf16.mxu0 0
        %497 = vmatpush1.bf16.msra.mxu0 0
        %498 = vmatprep.subr.bf16.mxu0 0
        %499 = vmatpush1.bf16.msra.mxu0 0
        %500 = vmatprep.subr.bf16.mxu0 0
        %501 = vmatpush1.bf16.msra.mxu0 0
        %502 = vmatprep.mubr.bf16.mxu0 0
        %503 = vmatmul.mubr.bf16.gmra.mrb[0].mxu0 %v400
        %v504 = vpop.f32.mrb[0].mxu0
        %v505 = vadd.f32 %v386, %v504
        %v506 = vpop.f32.mrb[0].mxu0
        %v507 = vadd.f32 %v386, %v506
        %v508 = vpop.f32.mrb[0].mxu0
        %v509 = vadd.f32 %v391, %v508
        %v510 = vpop.f32.mrb[0].mxu0
        %v511 = vadd.f32 %v391, %v510
        %512 = vdwg.mxu0
        %513 = vmatprep.subr.bf16.mxu0 %v419
        %514 = vmatpush1.bf16.msra.mxu0 %v416
        %515 = vmatprep.subr.bf16.mxu0 0
        %516 = vmatpush1.bf16.msra.mxu0 0
        %517 = vmatprep.subr.bf16.mxu0 0
        %518 = vmatpush1.bf16.msra.mxu0 0
        %519 = vmatprep.subr.bf16.mxu0 0
        %520 = vmatpush1.bf16.msra.mxu0 0
        %521 = vmatprep.subr.bf16.mxu0 0
        %522 = vmatpush1.bf16.msra.mxu0 0
        %523 = vmatprep.subr.bf16.mxu0 0
        %524 = vmatpush1.bf16.msra.mxu0 0
        %525 = vmatprep.subr.bf16.mxu0 0
        %526 = vmatpush1.bf16.msra.mxu0 0
        %527 = vmatprep.subr.bf16.mxu0 0
        %528 = vmatpush1.bf16.msra.mxu0 0
        %529 = vmatprep.subr.bf16.mxu0 0
        %530 = vmatpush1.bf16.msra.mxu0 0
        %531 = vmatprep.subr.bf16.mxu0 0
        %532 = vmatpush1.bf16.msra.mxu0 0
        %533 = vmatprep.subr.bf16.mxu0 0
        %534 = vmatpush1.bf16.msra.mxu0 0
        %535 = vmatprep.subr.bf16.mxu0 0
        %536 = vmatpush1.bf16.msra.mxu0 0
        %537 = vmatprep.subr.bf16.mxu0 0
        %538 = vmatpush1.bf16.msra.mxu0 0
        %539 = vmatprep.subr.bf16.mxu0 0
        %540 = vmatpush1.bf16.msra.mxu0 0
        %541 = vmatprep.subr.bf16.mxu0 0
        %542 = vmatpush1.bf16.msra.mxu0 0
        %543 = vmatprep.subr.bf16.mxu0 0
        %544 = vmatpush1.bf16.msra.mxu0 0
        %545 = vmatprep.mubr.bf16.mxu0 0
        %546 = vmatmul.mubr.bf16.gmra.mrb[0].mxu0 %v400
        %v547 = vpop.f32.mrb[0].mxu0
        %v548 = vadd.f32 %v386, %v547
        %v549 = vpop.f32.mrb[0].mxu0
        %v550 = vadd.f32 %v386, %v549
        %v551 = vpop.f32.mrb[0].mxu0
        %v552 = vadd.f32 %v391, %v551
        %v553 = vpop.f32.mrb[0].mxu0
        %v554 = vadd.f32 %v391, %v553
        %555 = vdwg.mxu0
        %556 = vmatprep.subr.bf16.mxu0 %v425
        %557 = vmatpush1.bf16.msra.mxu0 %v422
        %558 = vmatprep.subr.bf16.mxu0 0
        %559 = vmatpush1.bf16.msra.mxu0 0
        %560 = vmatprep.subr.bf16.mxu0 0
        %561 = vmatpush1.bf16.msra.mxu0 0
        %562 = vmatprep.subr.bf16.mxu0 0
        %563 = vmatpush1.bf16.msra.mxu0 0
        %564 = vmatprep.subr.bf16.mxu0 0
        %565 = vmatpush1.bf16.msra.mxu0 0
        %566 = vmatprep.subr.bf16.mxu0 0
        %567 = vmatpush1.bf16.msra.mxu0 0
        %568 = vmatprep.subr.bf16.mxu0 0
        %569 = vmatpush1.bf16.msra.mxu0 0
        %570 = vmatprep.subr.bf16.mxu0 0
        %571 = vmatpush1.bf16.msra.mxu0 0
        %572 = vmatprep.subr.bf16.mxu0 0
        %573 = vmatpush1.bf16.msra.mxu0 0
        %574 = vmatprep.subr.bf16.mxu0 0
        %575 = vmatpush1.bf16.msra.mxu0 0
        %576 = vmatprep.subr.bf16.mxu0 0
        %577 = vmatpush1.bf16.msra.mxu0 0
        %578 = vmatprep.subr.bf16.mxu0 0
        %579 = vmatpush1.bf16.msra.mxu0 0
        %580 = vmatprep.subr.bf16.mxu0 0
        %581 = vmatpush1.bf16.msra.mxu0 0
        %582 = vmatprep.subr.bf16.mxu0 0
        %583 = vmatpush1.bf16.msra.mxu0 0
        %584 = vmatprep.subr.bf16.mxu0 0
        %585 = vmatpush1.bf16.msra.mxu0 0
        %586 = vmatprep.subr.bf16.mxu0 0
        %587 = vmatpush1.bf16.msra.mxu0 0
        %588 = vmatprep.mubr.bf16.mxu0 0
        %589 = vmatmul.mubr.bf16.gmra.mrb[0].mxu0 %v400
        %v590 = vpop.f32.mrb[0].mxu0
        %v591 = vadd.f32 %v386, %v590
        %v592 = vpop.f32.mrb[0].mxu0
        %v593 = vadd.f32 %v386, %v592
        %v594 = vpop.f32.mrb[0].mxu0
        %v595 = vadd.f32 %v391, %v594
        %v596 = vpop.f32.mrb[0].mxu0
        %v597 = vadd.f32 %v391, %v596
        %598 = vdwg.mxu0
        %v599 = vpack.c.bf16 %v466, %v462
        %v600 = vpack.c.bf16 %v468, %v464
        %v601 = vpack.c.bf16 %v509, %v505
        %v602 = vpack.c.bf16 %v511, %v507
        %v603 = vpack.c.bf16 %v552, %v548
        %v604 = vpack.c.bf16 %v554, %v550
        %v605 = vpack.c.bf16 %v595, %v591
        %v606 = vpack.c.bf16 %v597, %v593
        %v615 = vunpack.c.l.b16 %v599
        %v616 = vunpack.c.l.b16 %v600
        %v617 = vunpack.c.l.b16 %v601
        %v618 = vunpack.c.l.b16 %v602
        %v619 = vunpack.c.l.b16 %v603
        %v620 = vunpack.c.l.b16 %v604
        %v621 = vunpack.c.l.b16 %v605
        %v622 = vunpack.c.l.b16 %v606
        %v623 = vunpack.c.h.b16 %v599
        %v624 = vunpack.c.h.b16 %v600
        %v625 = vunpack.c.h.b16 %v601
        %v626 = vunpack.c.h.b16 %v602
        %v627 = vunpack.c.h.b16 %v603
        %v628 = vunpack.c.h.b16 %v604
        %v629 = vunpack.c.h.b16 %v605
        %v630 = vunpack.c.h.b16 %v606
        %v631 = vpack.c.b16 %v616, %v615
        %v632 = vpack.c.b16 %v618, %v617
        %v633 = vpack.c.b16 %v620, %v619
        %v634 = vpack.c.b16 %v622, %v621
        %v635 = vpack.c.b16 %v624, %v623
        %v636 = vpack.c.b16 %v626, %v625
        %v637 = vpack.c.b16 %v628, %v627
        %v638 = vpack.c.b16 %v630, %v629
        %647 = vst [vmem:[%s304] sm:$0xff] %v631
        %648 = vst [vmem:[%s304 + $0x8] sm:$0xff] %v632
        %649 = vst [vmem:[%s304 + $0x10] sm:$0xff] %v633
        %650 = vst [vmem:[%s304 + $0x18] sm:$0xff] %v634
        %651 = vst [vmem:[%s304 + $0x20] sm:$0xff] %v635
        %652 = vst [vmem:[%s304 + $0x28] sm:$0xff] %v636
        %653 = vst [vmem:[%s304 + $0x30] sm:$0xff] %v637
        %654 = vst [vmem:[%s304 + $0x38] sm:$0xff] %v638
        %p655 = scmp.eq.s32.totalorder %s30, 0
        // Predicated region
        $region37: #{tpu_custom_call.1} parent=31 // pred_check
          %p656 = pneg %p655
        $region38: #{tpu_custom_call.1} parent=31 // pred_check_branch
          %658 = sbr.rel (%p656) target = $region40
        $region39: #{tpu_custom_call.1} parent=31 // pred_region
          %vm659 = vcmask 7168
          %660 = vst.msk [vmem:[#allocation2] sm:$0xff] %vm659, 0.0
          %661 = vst.msk [vmem:[#allocation2 + $0x8] sm:$0xff] %vm659, 0.0
          %662 = vst.msk [vmem:[#allocation3] sm:$0xff] %vm659, 0.0
          %663 = vst.msk [vmem:[#allocation3 + $0x8] sm:$0xff] %vm659, 0.0
        $region40: #{tpu_custom_call.1} parent=31 // pred_fallthru
          _
        %v664 = vld [vmem:[#allocation2] sm:$0xff]
        %v665 = vld [vmem:[#allocation2 + $0x8] sm:$0xff]
        %v666 = vadd.f32 %v462, %v464
        %v667 = vadd.f32 %v666, %v505
        %v668 = vadd.f32 %v667, %v507
        %v669 = vadd.f32 %v668, %v548
        %v670 = vadd.f32 %v669, %v550
        %v671 = vadd.f32 %v670, %v591
        %v672 = vadd.f32 %v671, %v593
        %673 = vadd.xlane.f32.xlu0 %v672
        %v674 = vpop.xlane.xlu0 %673
        %v675 = vadd.f32 %v466, %v468
        %v676 = vadd.f32 %v675, %v509
        %v677 = vadd.f32 %v676, %v511
        %v678 = vadd.f32 %v677, %v552
        %v679 = vadd.f32 %v678, %v554
        %v680 = vadd.f32 %v679, %v595
        %v681 = vadd.f32 %v680, %v597
        %682 = vadd.xlane.f32.xlu0 %v681
        %v683 = vpop.xlane.xlu0 %682
        %v684 = vadd.f32 %v664, %v674
        %v685 = vadd.f32 %v665, %v683
        %vm686 = vcmask 7168
        %687 = vst.msk [vmem:[#allocation2] sm:$0xff] %vm686, %v684
        %688 = vst.msk [vmem:[#allocation2 + $0x8] sm:$0xff] %vm686, %v685
        %v689 = vld [vmem:[#allocation3] sm:$0xff]
        %v690 = vld [vmem:[#allocation3 + $0x8] sm:$0xff]
        %v691 = vmul.f32 %v462, %v462
        %v692 = vmul.f32 %v464, %v464
        %v693 = vmul.f32 %v505, %v505
        %v694 = vmul.f32 %v507, %v507
        %v695 = vmul.f32 %v548, %v548
        %v696 = vmul.f32 %v550, %v550
        %v697 = vmul.f32 %v591, %v591
        %v698 = vmul.f32 %v593, %v593
        %v699 = vmul.f32 %v466, %v466
        %v700 = vmul.f32 %v468, %v468
        %v701 = vmul.f32 %v509, %v509
        %v702 = vmul.f32 %v511, %v511
        %v703 = vmul.f32 %v552, %v552
        %v704 = vmul.f32 %v554, %v554
        %v705 = vmul.f32 %v595, %v595
        %v706 = vmul.f32 %v597, %v597
        %v707 = vadd.f32 %v691, %v692
        %v708 = vadd.f32 %v707, %v693
        %v709 = vadd.f32 %v708, %v694
        %v710 = vadd.f32 %v709, %v695
        %v711 = vadd.f32 %v710, %v696
        %v712 = vadd.f32 %v711, %v697
        %v713 = vadd.f32 %v712, %v698
        %714 = vadd.xlane.f32.xlu0 %v713
        %v715 = vpop.xlane.xlu0 %714
        %v716 = vadd.f32 %v699, %v700
        %v717 = vadd.f32 %v716, %v701
        %v718 = vadd.f32 %v717, %v702
        %v719 = vadd.f32 %v718, %v703
        %v720 = vadd.f32 %v719, %v704
        %v721 = vadd.f32 %v720, %v705
        %v722 = vadd.f32 %v721, %v706
        %723 = vadd.xlane.f32.xlu0 %v722
        %v724 = vpop.xlane.xlu0 %723
        %v725 = vadd.f32 %v689, %v715
        %v726 = vadd.f32 %v690, %v724
        %727 = vst.msk [vmem:[#allocation3] sm:$0xff] %vm686, %v725
        %728 = vst.msk [vmem:[#allocation3 + $0x8] sm:$0xff] %vm686, %v726
        %p729 = scmp.eq.s32.totalorder %s30, 2
        // Predicated region
        $region41: #{tpu_custom_call.1} parent=31 // pred_check
          %p730 = pneg %p729
        $region42: #{tpu_custom_call.1} parent=31 // pred_check_branch
          %732 = sbr.rel (%p730) target = $region44
        $region43: #{tpu_custom_call.1} parent=31 // pred_region
          %v733 = vld [vmem:[#allocation2] sm:$0xff]
          %v734 = vld [vmem:[#allocation2 + $0x8] sm:$0xff]
          %735 = vst.msk [vmem:[%s350] sm:$0xff] %vm686, %v733
          %736 = vst.msk [vmem:[%s350 + $0x8] sm:$0xff] %vm686, %v734
          %v737 = vld [vmem:[#allocation3] sm:$0xff]
          %v738 = vld [vmem:[#allocation3 + $0x8] sm:$0xff]
          %739 = vst.msk [vmem:[%s360] sm:$0xff] %vm686, %v737
          %740 = vst.msk [vmem:[%s360 + $0x8] sm:$0xff] %vm686, %v738
        $region44: #{tpu_custom_call.1} parent=31 // pred_fallthru
          _
        %s741 = sand.u32 %s134, 1
        %s742 = scalar_lea.sflag [#allocation6], %s741
        %s743 = sand.u32 %s134, 1
        %s744 = smul.addr %s743, 64
        %s745 = scalar_lea.vmem [#allocation7], %s744
        %s746 = smul.u32 2, %s29
        %p747 = scmp.lt.s32.totalorder %s28, 1
        %s748 = scalar_select %p747, %s28, 1
        %p749 = scmp.lt.s32.totalorder %s746, 3
        %s750 = scalar_select %p749, %s746, 3
        %s751 = smul.addr %s748, 4
        %s752 = sadd.s32 %s750, %s751
        %s753 = smul.addr %s752, 8
        %s754 = scalar_lea.vmem %s4, %s753
        %s755 = smul.u32 2, %s29
        %p756 = scmp.lt.s32.totalorder %s28, 1
        %s757 = scalar_select %p756, %s28, 1
        %p758 = scmp.lt.s32.totalorder %s755, 3
        %s759 = scalar_select %p758, %s755, 3
        %s760 = smul.addr %s757, 4
        %s761 = sadd.s32 %s759, %s760
        %s762 = smul.addr %s761, 8
        %s763 = scalar_lea.vmem %s5, %s762
        // Predicated region
        $region45: #{tpu_custom_call.1} parent=31 // pred_check
          %p764 = pneg %p144
        $region46: #{tpu_custom_call.1} parent=31 // pred_check_branch
          %766 = sbr.rel (%p764) target = $region48
        $region47: #{tpu_custom_call.1} parent=31 // pred_region
          %s767 = smul.u32 2, %s29
          %s768 = smul.u32 8, %s30
          %s770 = ssub.s32 1024, 1024
          %771 = vsyncadd %s742, %s770
          %s772 = smul.addr %s767, 24
          %s773 = sadd.s32 %s768, %s772
          %s774 = smul.addr %s28, 96
          %s775 = sadd.s32 %s773, %s774
          %s776 = smul.addr %s775, 64
          %s777 = scalar_lea.hbm %s3, %s776
          %s778 = sshll.u32 %s745, 4
          %s779 = int_to_ptr.vmem [resolvable:$true] %s778
          %784 = dma.vmem_to_hbm [thread:$0]  %s779, 1024, %s777, %s742, 512, 1536, 32
        $region48: #{tpu_custom_call.1} parent=31 // pred_fallthru
          _
        // Predicated region
        $region49: #{tpu_custom_call.1} parent=31 // pred_check
          %p785 = pneg %p172
        $region50: #{tpu_custom_call.1} parent=31 // pred_check_branch
          %787 = sbr.rel (%p785) target = $region52
        $region51: #{tpu_custom_call.1} parent=31 // pred_region
          %s788 = smul.u32 2, %s29
        $region52: #{tpu_custom_call.1} parent=31 // pred_fallthru
          _
        // Predicated region
        $region53: #{tpu_custom_call.1} parent=31 // pred_check
          %p789 = pneg %p200
        $region54: #{tpu_custom_call.1} parent=31 // pred_check_branch
          %791 = sbr.rel (%p789) target = $region56
        $region55: #{tpu_custom_call.1} parent=31 // pred_region
          %s792 = smul.u32 2, %s29
        $region56: #{tpu_custom_call.1} parent=31 // pred_fallthru
          _
      $region32: #{tpu_custom_call.1} parent=5 // pred_fallthru
        _
      %p793 = scmp.le.s32.totalorder 2, %s18
      // Predicated region
      $region57: #{tpu_custom_call.1} parent=5 // pred_check
        %p794 = pneg %p793
      $region58: #{tpu_custom_call.1} parent=5 // pred_check_branch
        %796 = sbr.rel (%p794) target = $region60
      $region59: #{tpu_custom_call.1} parent=5 // pred_region
        %s797 = ssub.s32 %s18, 2
        // Predicated region
        $region61: #{tpu_custom_call.1} parent=59 // pred_check
          %p798 = pneg %p150
        $region62: #{tpu_custom_call.1} parent=59 // pred_check_branch
          %800 = sbr.rel (%p798) target = $region64
        $region63: #{tpu_custom_call.1} parent=59 // pred_region
          %s801 = sand.u32 %s135, 1
          %s802 = scalar_lea.sflag [#allocation6], %s801
          %s803 = sand.u32 %s135, 1
          %s804 = smul.addr %s803, 64
          %s805 = scalar_lea.vmem [#allocation7], %s804
          %806 = dma.done %s802, 1024
        $region64: #{tpu_custom_call.1} parent=59 // pred_fallthru
          _
        // Predicated region
        $region65: #{tpu_custom_call.1} parent=59 // pred_check
          %p807 = pneg %p178
        $region66: #{tpu_custom_call.1} parent=59 // pred_check_branch
          %809 = sbr.rel (%p807) target = $region68
        $region67: #{tpu_custom_call.1} parent=59 // pred_region
          %s810 = smul.u32 2, %s32
          %p811 = scmp.lt.s32.totalorder %s31, 1
          %s812 = scalar_select %p811, %s31, 1
          %p813 = scmp.lt.s32.totalorder %s810, 3
          %s814 = scalar_select %p813, %s810, 3
          %s815 = smul.addr %s812, 4
          %s816 = sadd.s32 %s814, %s815
          %s817 = smul.addr %s816, 8
          %s818 = scalar_lea.vmem %s4, %s817
        $region68: #{tpu_custom_call.1} parent=59 // pred_fallthru
          _
        // Predicated region
        $region69: #{tpu_custom_call.1} parent=59 // pred_check
          %p819 = pneg %p206
        $region70: #{tpu_custom_call.1} parent=59 // pred_check_branch
          %821 = sbr.rel (%p819) target = $region72
        $region71: #{tpu_custom_call.1} parent=59 // pred_region
          %s822 = smul.u32 2, %s32
          %p823 = scmp.lt.s32.totalorder %s31, 1
          %s824 = scalar_select %p823, %s31, 1
          %p825 = scmp.lt.s32.totalorder %s822, 3
          %s826 = scalar_select %p825, %s822, 3
          %s827 = smul.addr %s824, 4
          %s828 = sadd.s32 %s826, %s827
          %s829 = smul.addr %s828, 8
          %s830 = scalar_lea.vmem %s5, %s829
        $region72: #{tpu_custom_call.1} parent=59 // pred_fallthru
          _
      $region60: #{tpu_custom_call.1} parent=5 // pred_fallthru
        _
    $region6: #{tpu_custom_call.1} parent=1 // loop_footer
      %s22 = sadd.s32 1, %s18
    $region7: #{tpu_custom_call.1} parent=1 // loop_footer_branch
      %17 = sbr.rel target = $region3
    $region8: #{tpu_custom_call.1} parent=1 // loop_exit
      _
    %831 = vsyncpa [#allocation5], 1
    %s832 = scalar_lea.sflag [#allocation5], 1
    %833 = vsyncpa %s832, 1
    %834 = vsyncpa [#allocation6], 1
    %s835 = scalar_lea.sflag [#allocation6], 1
    %836 = vsyncpa %s835, 1

</llo_original>
